<compile_context>
chip_gen: v7x
topology: tpu7x:2x2x1
jax: 0.10.0
libtpu: 0.0.40
codegen_flags: <defaults>
</compile_context>

<pallas_src>
import jax
import jax.numpy as jnp
from jax import lax
from jax.experimental import pallas as pl
from jax.experimental.pallas import tpu as pltpu


def _dense_transition_kernel(x_ref, ss_ref, p_ref, w_ref, out_ref):
    # x_ref:   (1, Cin, Lb)    Lb = 2*k*W flat input pixels (k pooled rows), input dtype
    # ss_ref:  (Cin, 2)        col 0 = folded BN scale, col 1 = folded BN shift
    # p_ref:   (Lb, OW)        0.25-weighted 2x2/stride-2 pooling matrix (bf16)
    # w_ref:   (Cout, Cin)     1x1-conv weight (bf16)
    # out_ref: (1, Cout, OW)   OW = k*Wo pooled pixels
    ss = ss_ref[...]
    s = ss[:, 0:1]
    t = ss[:, 1:2]

    # BatchNorm (folded affine) + ReLU, in the input dtype (no wrapper upcast).
    z = jnp.maximum(x_ref[0] * s + t, 0.0).astype(jnp.bfloat16)

    # 2x2 average pool as a matmul over flat pixels (MXU; kernel is HBM-bound).
    pooled = jnp.dot(z, p_ref[...], preferred_element_type=jnp.float32)

    # 1x1 conv (channel contraction) on the pooled, 4x-smaller pixel set.
    out = jnp.dot(w_ref[...], pooled.astype(jnp.bfloat16),
                  preferred_element_type=jnp.float32)
    out_ref[0] = out.astype(out_ref.dtype)


def _pick_rows_per_step(Ho, W, Cin, Cout, in_bytes, out_bytes, budget):
    """Pick k = pooled output rows per grid step (k must divide Ho).

    Bytes-aware (accounts for Cin/Cout/dtypes and double-buffering), caps the
    pooling-matrix size (bounds the extra MXU work), prefers 128-lane-aligned
    input blocks for unmasked loads/stores.
    """
    Wo = W // 2
    feasible = []
    for k in range(1, Ho + 1):
        if Ho % k:
            continue
        Lb, OW = 2 * k * W, k * Wo
        p_bytes = Lb * OW * 2
        est = (2 * Cin * Lb * in_bytes        # x block, double-buffered
               + 2 * Cout * OW * out_bytes    # out block, double-buffered
               + 2 * p_bytes                  # pool matrix (bf16)
               + 2 * Cout * Cin * 2           # conv weight (bf16)
               + Cin * Lb * (in_bytes + 2)    # z + bf16 staging
               + Cin * OW * 6                 # pooled f32 + bf16 staging
               + Cin * 2 * in_bytes)          # scale/shift
        ok = est <= budget and p_bytes <= (4 << 20) and OW <= 2048
        if ok or k == 1:                      # k=1 kept as last-resort fallback
            feasible.append((k, Lb % 128 == 0))
    aligned = [k for k, a in feasible if a]
    return max(aligned) if aligned else max(k for k, _ in feasible)


def dense_transition_pallas(x_nchw, params, eps=1e-5):
    """params = (gamma, beta, running_mean, running_var, conv_weight[Cout, Cin])."""
    gamma, beta, mean, var, w = params
    N, Cin, H, W = x_nchw.shape
    assert H % 2 == 0 and W % 2 == 0, "AvgPool2d(kernel=2, stride=2) needs even H, W"
    Ho, Wo = H // 2, W // 2
    Cout = w.shape[0]

    in_dtype = x_nchw.dtype
    out_dtype = in_dtype
    in_bytes = jnp.dtype(in_dtype).itemsize
    out_bytes = jnp.dtype(out_dtype).itemsize

    # Fold inference-mode BatchNorm into a per-channel (scale, shift) pair.
    inv = (gamma.astype(jnp.float32) /
           jnp.sqrt(var.astype(jnp.float32) + eps))
    shift = beta.astype(jnp.float32) - mean.astype(jnp.float32) * inv
    ss = jnp.stack([inv, shift], axis=1).astype(in_dtype)          # (Cin, 2)
    w_bf16 = w.astype(jnp.bfloat16)                                # (Cout, Cin)

    # VMEM budget: generation-aware with a 48 MiB cap (safe on v7x's 64 MiB/TC).
    try:
        cap = int(pltpu.get_tpu_info().vmem_capacity_bytes)
    except Exception:
        cap = 64 << 20
    vmem_limit = min(48 << 20, (cap * 3) // 4)
    budget = (vmem_limit * 3) // 5

    k = _pick_rows_per_step(Ho, W, Cin, Cout, in_bytes, out_bytes, budget)
    Lb, OW = 2 * k * W, k * Wo          # flat input / pooled pixels per step

    # Pooling matrix: flat input pixel l (within a 2k-row band) contributes 0.25
    # to flat pooled pixel m iff it lies in m's 2x2 window.  0.25 is exact in bf16.
    l = jnp.arange(Lb)
    m = jnp.arange(OW)
    pool_mat = jnp.where(
        ((l[:, None] // W) // 2 == m[None, :] // Wo)
        & ((l[:, None] % W) // 2 == m[None, :] % Wo),
        0.25, 0.0).astype(jnp.bfloat16)                            # (Lb, OW)

    # Free row-major reshape: no transpose pass, no dtype upcast.
    x_flat = x_nchw.reshape(N, Cin, H * W)
    grid = (N, Ho // k)

    flops = (2 * N * (Ho // k) * Cin * Lb * OW        # pool matmul
             + 2 * N * Cout * Cin * Ho * Wo)          # 1x1 conv
    bytes_accessed = (N * Cin * H * W * in_bytes
                      + N * Cout * Ho * Wo * out_bytes
                      + Cout * Cin * 2 + Lb * OW * 2 + Cin * 2 * in_bytes)

    out = pl.pallas_call(
        _dense_transition_kernel,
        out_shape=jax.ShapeDtypeStruct((N, Cout, Ho * Wo), out_dtype),
        grid=grid,
        in_specs=[
            pl.BlockSpec((1, Cin, Lb), lambda n, t: (n, 0, t)),
            pl.BlockSpec((Cin, 2), lambda n, t: (0, 0)),
            pl.BlockSpec((Lb, OW), lambda n, t: (0, 0)),
            pl.BlockSpec((Cout, Cin), lambda n, t: (0, 0)),
        ],
        out_specs=pl.BlockSpec((1, Cout, OW), lambda n, t: (n, 0, t)),
        compiler_params=pltpu.CompilerParams(
            dimension_semantics=("parallel", "parallel"),
            vmem_limit_bytes=int(vmem_limit)),
        cost_estimate=pl.CostEstimate(flops=int(flops), transcendentals=0,
                                      bytes_accessed=int(bytes_accessed)),
    )(x_flat, ss, pool_mat, w_bf16)

    # (N, Cout, Ho*Wo) -> NCHW, free reshape.
    return out.reshape(N, Cout, Ho, Wo)


def dense_transition_ref(x_nchw, params, eps=1e-5):
    """Pure-JAX reference matching the PyTorch forward (eval-mode BN)."""
    gamma, beta, mean, var, w = params
    inv = (gamma / jnp.sqrt(var + eps))[None, :, None, None]
    sh = (beta - mean * gamma / jnp.sqrt(var + eps))[None, :, None, None]
    z = jnp.maximum(x_nchw * inv + sh, 0.0)                        # BN + ReLU
    y = jnp.einsum("nchw,oc->nohw", z, w,
                   precision=lax.Precision.HIGHEST)                # 1x1 conv, no bias
    n, co, h, ww = y.shape
    y = y.reshape(n, co, h // 2, 2, ww // 2, 2).mean(axis=(3, 5))  # AvgPool2d(2, 2)
    return y


if __name__ == "__main__":
    key = jax.random.PRNGKey(0)
    N, Cin, H, W = 2, 8, 16, 16
    Cout = 4  # compression factor 0.5 (typical DenseNet transition)

    ks = jax.random.split(key, 6)
    gamma = 1.0 + 0.1 * jax.random.normal(ks[0], (Cin,), jnp.float32)
    beta = 0.1 * jax.random.normal(ks[1], (Cin,), jnp.float32)
    running_mean = 0.2 * jax.random.normal(ks[2], (Cin,), jnp.float32)
    running_var = jax.random.uniform(ks[3], (Cin,), jnp.float32, 0.5, 1.5)
    conv_w = 0.1 * jax.random.normal(ks[4], (Cout, Cin), jnp.float32)
    x = jax.random.normal(ks[5], (N, Cin, H, W), jnp.float32)

    params = (gamma, beta, running_mean, running_var, conv_w)

    out = jax.block_until_ready(dense_transition_pallas(x, params))
    ref = dense_transition_ref(x, params)

    assert out.shape == (N, Cout, H // 2, W // 2), out.shape
    max_err = float(jnp.max(jnp.abs(out.astype(jnp.float32) - ref)))
    # bf16-operand MXU matmuls (DEFAULT precision) vs f32 reference.
    assert jnp.allclose(out.astype(jnp.float32), ref, atol=2e-2, rtol=2e-2), max_err
    print("KERNEL_OK")
</pallas_src>

<mosaic_0001>
module attributes {stable_mosaic.version = 11 : i64} {
  func.func @_dense_transition_kernel(%arg0: i32, %arg1: i32, %arg2: memref<1x8x256xf32, #tpu.memory_space<vmem>>, %arg3: memref<8x2xf32, #tpu.memory_space<vmem>>, %arg4: memref<256x64xbf16, #tpu.memory_space<vmem>>, %arg5: memref<4x8xbf16, #tpu.memory_space<vmem>>, %arg6: memref<1x4x64xf32, #tpu.memory_space<vmem>>) attributes {dimension_semantics = [#tpu.dimension_semantics<parallel>, #tpu.dimension_semantics<parallel>], iteration_bounds = array<i64: 2, 1>, scalar_prefetch = 0 : i64, scratch_operands = 0 : i64, tpu.core_type = #tpu.core_type<tc>, window_params = [{transform_indices = @transform_0, window_bounds = array<i64: 1, 8, 256>}, {pipeline_mode = #tpu.pipeline_mode<synchronous>, transform_indices = @transform_1, window_bounds = array<i64: 8, 2>}, {pipeline_mode = #tpu.pipeline_mode<synchronous>, transform_indices = @transform_2, window_bounds = array<i64: 256, 64>}, {pipeline_mode = #tpu.pipeline_mode<synchronous>, transform_indices = @transform_3, window_bounds = array<i64: 4, 8>}, {transform_indices = @transform_4, window_bounds = array<i64: 1, 4, 64>}]} {
    %c0 = arith.constant 0 : index
    %c0_0 = arith.constant 0 : index
    %0 = vector.load %arg3[%c0, %c0_0] : memref<8x2xf32, #tpu.memory_space<vmem>>, vector<8x2xf32>
    %1 = vector.extract_strided_slice %0 {offsets = [0, 0], sizes = [8, 1], strides = [1, 1]} : vector<8x2xf32> to vector<8x1xf32>
    %2 = vector.extract_strided_slice %0 {offsets = [0, 1], sizes = [8, 1], strides = [1, 1]} : vector<8x2xf32> to vector<8x1xf32>
    %c0_1 = arith.constant 0 : index
    %c0_2 = arith.constant 0 : index
    %c0_3 = arith.constant 0 : index
    %3 = vector.load %arg2[%c0_1, %c0_2, %c0_3] : memref<1x8x256xf32, #tpu.memory_space<vmem>>, vector<1x8x256xf32>
    %4 = vector.shape_cast %3 : vector<1x8x256xf32> to vector<8x256xf32>
    %5 = vector.broadcast %1 : vector<8x1xf32> to vector<8x256xf32>
    %6 = arith.mulf %4, %5 : vector<8x256xf32>
    %7 = vector.broadcast %2 : vector<8x1xf32> to vector<8x256xf32>
    %8 = arith.addf %6, %7 : vector<8x256xf32>
    %cst = arith.constant 0.000000e+00 : f32
    %9 = vector.broadcast %cst : f32 to vector<8x256xf32>
    %10 = arith.maximumf %8, %9 : vector<8x256xf32>
    %11 = arith.truncf %10 : vector<8x256xf32> to vector<8x256xbf16>
    %c0_4 = arith.constant 0 : index
    %c0_5 = arith.constant 0 : index
    %12 = vector.load %arg4[%c0_4, %c0_5] : memref<256x64xbf16, #tpu.memory_space<vmem>>, vector<256x64xbf16>
    %cst_6 = arith.constant dense<0.000000e+00> : vector<8x64xf32>
    %13 = tpu.matmul %11, %12, %cst_6 {dimension_numbers = #tpu.dot_dimension_numbers<[1], [0], [0], [1], [0, 0, 1, 1], [], []>} : vector<8x256xbf16>, vector<256x64xbf16>, vector<8x64xf32> -> vector<8x64xf32>
    %c0_7 = arith.constant 0 : index
    %c0_8 = arith.constant 0 : index
    %14 = vector.load %arg5[%c0_7, %c0_8] : memref<4x8xbf16, #tpu.memory_space<vmem>>, vector<4x8xbf16>
    %15 = arith.truncf %13 : vector<8x64xf32> to vector<8x64xbf16>
    %cst_9 = arith.constant dense<0.000000e+00> : vector<4x64xf32>
    %16 = tpu.matmul %14, %15, %cst_9 {dimension_numbers = #tpu.dot_dimension_numbers<[1], [0], [0], [1], [0, 0, 1, 1], [], []>} : vector<4x8xbf16>, vector<8x64xbf16>, vector<4x64xf32> -> vector<4x64xf32>
    %c0_10 = arith.constant 0 : index
    %c0_11 = arith.constant 0 : index
    %c0_12 = arith.constant 0 : index
    %17 = vector.load %arg6[%c0_10, %c0_11, %c0_12] : memref<1x4x64xf32, #tpu.memory_space<vmem>>, vector<1x4x64xf32>
    %18 = vector.shape_cast %17 : vector<1x4x64xf32> to vector<4x64xf32>
    %19 = vector.shape_cast %16 : vector<4x64xf32> to vector<1x4x64xf32>
    tpu.vector_store %arg6[%c0_10, %c0_11, %c0_12], %19 {strides = array<i32>} : memref<1x4x64xf32, #tpu.memory_space<vmem>>, vector<1x4x64xf32>,
    return
  }
  func.func @transform_0(%arg0: i32, %arg1: i32) -> (i32, i32, i32) {
    %c0_i32 = arith.constant 0 : i32
    %c0_i32_0 = arith.constant 0 : i32
    return %arg0, %c0_i32, %arg1 : i32, i32, i32
  }
  func.func @transform_1(%arg0: i32, %arg1: i32) -> (i32, i32) {
    %c0_i32 = arith.constant 0 : i32
    %c0_i32_0 = arith.constant 0 : i32
    %c0_i32_1 = arith.constant 0 : i32
    return %c0_i32, %c0_i32_0 : i32, i32
  }
  func.func @transform_2(%arg0: i32, %arg1: i32) -> (i32, i32) {
    %c0_i32 = arith.constant 0 : i32
    %c0_i32_0 = arith.constant 0 : i32
    %c0_i32_1 = arith.constant 0 : i32
    return %c0_i32, %c0_i32_0 : i32, i32
  }
  func.func @transform_3(%arg0: i32, %arg1: i32) -> (i32, i32) {
    %c0_i32 = arith.constant 0 : i32
    %c0_i32_0 = arith.constant 0 : i32
    %c0_i32_1 = arith.constant 0 : i32
    return %c0_i32, %c0_i32_0 : i32, i32
  }
  func.func @transform_4(%arg0: i32, %arg1: i32) -> (i32, i32, i32) {
    %c0_i32 = arith.constant 0 : i32
    %c0_i32_0 = arith.constant 0 : i32
    return %arg0, %c0_i32, %arg1 : i32, i32, i32
  }
}

</mosaic_0001>

<llo_original>
// kernel: tpu_custom_call.1
$region0: #{tpu_custom_call.1}
  #allocation0 [shape = 'u32[]', space=smem, size = 0x4, offset = 0x4, fixed_abs, tag = 'smem constant byte address 0x4 - core index']
  #allocation1 [shape = 'u32[144,128]{1,0:T(1,128)}', space=vmem, size = 0x12000, scoped, tag = 'internal scratch']
  %s0 = inlined_call_operand.vmem [shape: f32[2,8,256], index: 0, kind: input, shape index: {}]
  %s1 = inlined_call_operand.vmem [shape: f32[8,2], index: 1, kind: input, shape index: {}]
  %s2 = inlined_call_operand.vmem [shape: bf16[256,64], index: 2, kind: input, shape index: {}]
  %s3 = inlined_call_operand.vmem [shape: bf16[4,8], index: 3, kind: input, shape index: {}]
  %s4 = inlined_call_operand.hbm [shape: f32[2,4,64], index: 4, kind: output, shape index: {}]
  %s5 = sld [smem:[#allocation0]]
  $region49: #{tpu_custom_call.1} parent=0
    _
  %s7 = ssub.s32 1, %s5
  %s8 = scalar_select 0, %s7, %s5
  $region1: #{tpu_custom_call.1} parent=0
    #allocation2 [shape = 'u8[4096]{0}', space=vmem, size = 0x1000, scoped, tag = 'output window, operand 0']
    #allocation3 [shape = 's32[2]{0}', space=sflag, size = 0x8, scoped, tag = 'scoped memory for tpu_custom_call.1']
    %9 = vsyncpa [#allocation3], 0
    %s10 = scalar_lea.sflag [#allocation3], 1
    %11 = vsyncpa %s10, 0
    loop: start=0, step=1, limit=4
    $region2: #{tpu_custom_call.1} parent=1 // loop_pre_header
      _
    $region3: #{tpu_custom_call.1} parent=1 // loop_header
      %s13 = sphi 0, %s17
      %p14 = scmp.ge.s32.totalorder %s13, 4
      %s20 = sphi 0, %s32
      %s21 = sphi 0, %s28
      %s22 = sphi 0, %s20
      %s23 = sphi 0, %s21
      %s24 = sphi 0, %s22
      %s25 = sphi 0, %s23
      %s37 = sphi 0, %s39
      %s40 = sphi 0, %s37
      %s41 = sphi 0, %s40
      %s57 = sphi 0, %s41
      %s61 = sphi 0, %s61
      %s63 = sphi 0, %s61
      %s64 = sphi 0, %s63
      %s78 = sphi 0, %s64
      %s82 = sphi 0, %s82
      %s84 = sphi 0, %s82
      %s85 = sphi 0, %s84
      %s99 = sphi 0, %s85
      %s103 = sphi 0, %s103
      %s105 = sphi 0, %s103
      %s106 = sphi 0, %s105
      %s120 = sphi 0, %s106
      %s128 = sphi 0, %s130
      %s131 = sphi 0, %s128
      %s132 = sphi 0, %s131
      %s148 = sphi 0, %s132
    $region4: #{tpu_custom_call.1} parent=1 // loop_header_branch
      %16 = sbr.rel (%p14) target = $region8
    $region5: #{tpu_custom_call.1} parent=1 // loop_body
      %s18 = ssub.s32 %s13, 1
      %s19 = ssub.s32 %s13, 2
      %s26 = sadd.s32 1, %s21
      %p27 = scmp.ge.s32.totalorder %s26, 1
      %s28 = scalar_select %p27, 0, %s26
      %s29 = sadd.s32 1, %s20
      %s30 = scalar_select %p27, %s29, %s20
      %p31 = scmp.ge.s32.totalorder %s30, 2
      %s32 = scalar_select %p31, 0, %s30
      %s33 = ssub.s32 %s20, %s32
      %s34 = ssub.s32 %s21, %s28
      %s35 = sor.u32 %s33, %s34
      %p36 = scmp.eq.s32.totalorder %s35, 0
      %s38 = sadd.s32 %s37, 1
      %s39 = scalar_select %p36, %s37, %s38
      %p42 = pneg %p36
      %p43 = scmp.eq.s32.totalorder %s13, 1
      %p44 = por %p42, %p43
      %p45 = scmp.ne.s32.totalorder %s37, %s40
      %p46 = scmp.eq.s32.totalorder %s13, 0
      %p47 = por %p45, %p46
      %p48 = scmp.ne.s32.totalorder %s37, %s40
      %p49 = scmp.eq.s32.totalorder %s18, 1
      %p50 = por %p48, %p49
      %p51 = scmp.ne.s32.totalorder %s40, %s41
      %p52 = scmp.eq.s32.totalorder %s18, 0
      %p53 = por %p51, %p52
      %p54 = scmp.ne.s32.totalorder %s40, %s41
      %p55 = scmp.eq.s32.totalorder %s19, 1
      %p56 = por %p54, %p55
      %p58 = scmp.ne.s32.totalorder %s41, %s57
      %p59 = scmp.eq.s32.totalorder %s19, 0
      %p60 = por %p58, %p59
      %s62 = sadd.s32 %s61, 1
      %p65 = scmp.eq.s32.totalorder %s13, 1
      %p66 = scmp.ne.s32.totalorder %s61, %s63
      %p67 = scmp.eq.s32.totalorder %s13, 0
      %p68 = por %p66, %p67
      %p69 = scmp.ne.s32.totalorder %s61, %s63
      %p70 = scmp.eq.s32.totalorder %s18, 1
      %p71 = por %p69, %p70
      %p72 = scmp.ne.s32.totalorder %s63, %s64
      %p73 = scmp.eq.s32.totalorder %s18, 0
      %p74 = por %p72, %p73
      %p75 = scmp.ne.s32.totalorder %s63, %s64
      %p76 = scmp.eq.s32.totalorder %s19, 1
      %p77 = por %p75, %p76
      %p79 = scmp.ne.s32.totalorder %s64, %s78
      %p80 = scmp.eq.s32.totalorder %s19, 0
      %p81 = por %p79, %p80
      %s83 = sadd.s32 %s82, 1
      %p86 = scmp.eq.s32.totalorder %s13, 1
      %p87 = scmp.ne.s32.totalorder %s82, %s84
      %p88 = scmp.eq.s32.totalorder %s13, 0
      %p89 = por %p87, %p88
      %p90 = scmp.ne.s32.totalorder %s82, %s84
      %p91 = scmp.eq.s32.totalorder %s18, 1
      %p92 = por %p90, %p91
      %p93 = scmp.ne.s32.totalorder %s84, %s85
      %p94 = scmp.eq.s32.totalorder %s18, 0
      %p95 = por %p93, %p94
      %p96 = scmp.ne.s32.totalorder %s84, %s85
      %p97 = scmp.eq.s32.totalorder %s19, 1
      %p98 = por %p96, %p97
      %p100 = scmp.ne.s32.totalorder %s85, %s99
      %p101 = scmp.eq.s32.totalorder %s19, 0
      %p102 = por %p100, %p101
      %s104 = sadd.s32 %s103, 1
      %p107 = scmp.eq.s32.totalorder %s13, 1
      %p108 = scmp.ne.s32.totalorder %s103, %s105
      %p109 = scmp.eq.s32.totalorder %s13, 0
      %p110 = por %p108, %p109
      %p111 = scmp.ne.s32.totalorder %s103, %s105
      %p112 = scmp.eq.s32.totalorder %s18, 1
      %p113 = por %p111, %p112
      %p114 = scmp.ne.s32.totalorder %s105, %s106
      %p115 = scmp.eq.s32.totalorder %s18, 0
      %p116 = por %p114, %p115
      %p117 = scmp.ne.s32.totalorder %s105, %s106
      %p118 = scmp.eq.s32.totalorder %s19, 1
      %p119 = por %p117, %p118
      %p121 = scmp.ne.s32.totalorder %s106, %s120
      %p122 = scmp.eq.s32.totalorder %s19, 0
      %p123 = por %p121, %p122
      %s124 = ssub.s32 %s20, %s32
      %s125 = ssub.s32 %s21, %s28
      %s126 = sor.u32 %s124, %s125
      %p127 = scmp.eq.s32.totalorder %s126, 0
      %s129 = sadd.s32 %s128, 1
      %s130 = scalar_select %p127, %s128, %s129
      %p133 = pneg %p127
      %p134 = scmp.eq.s32.totalorder %s13, 1
      %p135 = por %p133, %p134
      %p136 = scmp.ne.s32.totalorder %s128, %s131
      %p137 = scmp.eq.s32.totalorder %s13, 0
      %p138 = por %p136, %p137
      %p139 = scmp.ne.s32.totalorder %s128, %s131
      %p140 = scmp.eq.s32.totalorder %s18, 1
      %p141 = por %p139, %p140
      %p142 = scmp.ne.s32.totalorder %s131, %s132
      %p143 = scmp.eq.s32.totalorder %s18, 0
      %p144 = por %p142, %p143
      %p145 = scmp.ne.s32.totalorder %s131, %s132
      %p146 = scmp.eq.s32.totalorder %s19, 1
      %p147 = por %p145, %p146
      %p149 = scmp.ne.s32.totalorder %s132, %s148
      %p150 = scmp.eq.s32.totalorder %s19, 0
      %p151 = por %p149, %p150
      %p152 = scmp.le.s32.totalorder 1, %s13
      %p153 = scmp.lt.s32.totalorder %s13, 3
      %p154 = pnand %p152, %p153
      %p155 = pneg %p154
      // Predicated region
      $region9: #{tpu_custom_call.1} parent=5 // pred_check
        _
      $region10: #{tpu_custom_call.1} parent=5 // pred_check_branch
        %157 = sbr.rel (%p154) target = $region12
      $region11: #{tpu_custom_call.1} parent=5 // pred_region
        %s158 = ssub.s32 %s13, 1
        // Predicated region
        $region13: #{tpu_custom_call.1} parent=11 // pred_check
          %p159 = pneg %p74
        $region14: #{tpu_custom_call.1} parent=11 // pred_check_branch
          %161 = sbr.rel (%p159) target = $region16
        $region15: #{tpu_custom_call.1} parent=11 // pred_region
          _
        $region16: #{tpu_custom_call.1} parent=11 // pred_fallthru
          _
        // Predicated region
        $region17: #{tpu_custom_call.1} parent=11 // pred_check
          %p162 = pneg %p95
        $region18: #{tpu_custom_call.1} parent=11 // pred_check_branch
          %164 = sbr.rel (%p162) target = $region20
        $region19: #{tpu_custom_call.1} parent=11 // pred_region
          _
        $region20: #{tpu_custom_call.1} parent=11 // pred_fallthru
          _
        // Predicated region
        $region21: #{tpu_custom_call.1} parent=11 // pred_check
          %p165 = pneg %p116
        $region22: #{tpu_custom_call.1} parent=11 // pred_check_branch
          %167 = sbr.rel (%p165) target = $region24
        $region23: #{tpu_custom_call.1} parent=11 // pred_region
          _
        $region24: #{tpu_custom_call.1} parent=11 // pred_fallthru
          _
      $region12: #{tpu_custom_call.1} parent=5 // pred_fallthru
        _
      %p168 = scmp.lt.s32.totalorder %s13, 2
      // Predicated region
      $region25: #{tpu_custom_call.1} parent=5 // pred_check
        %p169 = pneg %p168
      $region26: #{tpu_custom_call.1} parent=5 // pred_check_branch
        %171 = sbr.rel (%p169) target = $region28
      $region27: #{tpu_custom_call.1} parent=5 // pred_region
        // Predicated region
        $region29: #{tpu_custom_call.1} parent=27 // pred_check
          %p172 = pneg %p47
        $region30: #{tpu_custom_call.1} parent=27 // pred_check_branch
          %174 = sbr.rel (%p172) target = $region32
        $region31: #{tpu_custom_call.1} parent=27 // pred_region
          %s175 = smul.u32 2, %s21
          %p176 = scmp.lt.s32.totalorder %s20, 1
          %s177 = scalar_select %p176, %s20, 1
          %p178 = scmp.lt.s32.totalorder %s175, 1
          %s179 = scalar_select %p178, %s175, 1
          %s180 = smul.addr %s177, 2
          %s181 = sadd.s32 %s179, %s180
          %s182 = smul.addr %s181, 8
          %s183 = scalar_lea.vmem %s0, %s182
          %s184 = smul.u32 2, %s21
        $region32: #{tpu_custom_call.1} parent=27 // pred_fallthru
          _
      $region28: #{tpu_custom_call.1} parent=5 // pred_fallthru
        _
      %p185 = scmp.le.s32.totalorder 1, %s13
      %p186 = scmp.lt.s32.totalorder %s13, 3
      %p187 = pnand %p185, %p186
      %p188 = pneg %p187
      // Predicated region
      $region33: #{tpu_custom_call.1} parent=5 // pred_check
        _
      $region34: #{tpu_custom_call.1} parent=5 // pred_check_branch
        %190 = sbr.rel (%p187) target = $region36
      $region35: #{tpu_custom_call.1} parent=5 // pred_region
        %s191 = ssub.s32 %s13, 1
        %s192 = smul.u32 2, %s23
        %p193 = scmp.lt.s32.totalorder %s22, 1
        %s194 = scalar_select %p193, %s22, 1
        %p195 = scmp.lt.s32.totalorder %s192, 1
        %s196 = scalar_select %p195, %s192, 1
        %s197 = smul.addr %s194, 2
        %s198 = sadd.s32 %s196, %s197
        %s199 = smul.addr %s198, 8
        %s200 = scalar_lea.vmem %s0, %s199
        %p201 = pneg %p53
        %p202 = pneg %p50
        %p203 = pneg %p74
        %p204 = pneg %p71
        %p205 = pneg %p95
        %p206 = pneg %p92
        %p207 = pneg %p116
        %p208 = pneg %p113
        %p209 = pneg %p144
        %p210 = pneg %p141
        %s211 = sand.u32 %s131, 1
        %s212 = scalar_lea.sflag [#allocation3], %s211
        %s213 = sand.u32 %s131, 1
        %s214 = smul.addr %s213, 4
        %s215 = scalar_lea.vmem [#allocation2], %s214
        %s216 = smul.u32 2, %s23
        %p217 = scmp.lt.s32.totalorder %s22, 1
        %s218 = scalar_select %p217, %s22, 1
        %p219 = scmp.lt.s32.totalorder %s216, 1
        %s220 = scalar_select %p219, %s216, 1
        %s221 = smul.addr %s218, 2
        %s222 = sadd.s32 %s220, %s221
        %s223 = smul.addr %s222, 8
        %s224 = scalar_lea.vmem %s0, %s223
        %s225 = smul.u32 2, %s23
        %v227 = vld [vmem:[%s1] sm:$0xff]
        %v228 = vld [vmem:[%s224] sm:$0xff]
        %v229 = vld [vmem:[%s224 + $0x8] sm:$0xff]
        %231 = vset.pattern.permute.xlu0 0
        %232 = vperm.xlu0 %231, %v227
        %v233 = vpop.permute.xlu0 %232
        %v235 = vmul.f32 %v228, %v233
        %v236 = vmul.f32 %v229, %v233
        %237 = vset.pattern.permute.xlu0 1
        %238 = vperm.xlu0 %237, %v227
        %v239 = vpop.permute.xlu0 %238
        %v241 = vadd.f32 %v235, %v239
        %v242 = vadd.f32 %v236, %v239
        %v243 = vmax.f32 %v241, 0.0
        %v244 = vmax.f32 %v242, 0.0
        %v245 = vpack.c.bf16 %v243, %v243
        %v246 = vpack.c.bf16 %v244, %v244
        %v247 = vld [vmem:[%s2] sm:$0xf]
        %v248 = vld [vmem:[%s2 + $0x4] sm:$0xf]
        %v249 = vld [vmem:[%s2 + $0x8] sm:$0xf]
        %v250 = vld [vmem:[%s2 + $0xc] sm:$0xf]
        %v251 = vld [vmem:[%s2 + $0x10] sm:$0xf]
        %v252 = vld [vmem:[%s2 + $0x14] sm:$0xf]
        %v253 = vld [vmem:[%s2 + $0x18] sm:$0xf]
        %v254 = vld [vmem:[%s2 + $0x1c] sm:$0xf]
        %v255 = vld [vmem:[%s2 + $0x20] sm:$0xf]
        %v256 = vld [vmem:[%s2 + $0x24] sm:$0xf]
        %v257 = vld [vmem:[%s2 + $0x28] sm:$0xf]
        %v258 = vld [vmem:[%s2 + $0x2c] sm:$0xf]
        %v259 = vld [vmem:[%s2 + $0x30] sm:$0xf]
        %v260 = vld [vmem:[%s2 + $0x34] sm:$0xf]
        %v261 = vld [vmem:[%s2 + $0x38] sm:$0xf]
        %v262 = vld [vmem:[%s2 + $0x3c] sm:$0xf]
        %v263 = vld [vmem:[%s2 + $0x40] sm:$0xf]
        %v264 = vld [vmem:[%s2 + $0x44] sm:$0xf]
        %v265 = vld [vmem:[%s2 + $0x48] sm:$0xf]
        %v266 = vld [vmem:[%s2 + $0x4c] sm:$0xf]
        %v267 = vld [vmem:[%s2 + $0x50] sm:$0xf]
        %v268 = vld [vmem:[%s2 + $0x54] sm:$0xf]
        %v269 = vld [vmem:[%s2 + $0x58] sm:$0xf]
        %v270 = vld [vmem:[%s2 + $0x5c] sm:$0xf]
        %v271 = vld [vmem:[%s2 + $0x60] sm:$0xf]
        %v272 = vld [vmem:[%s2 + $0x64] sm:$0xf]
        %v273 = vld [vmem:[%s2 + $0x68] sm:$0xf]
        %v274 = vld [vmem:[%s2 + $0x6c] sm:$0xf]
        %v275 = vld [vmem:[%s2 + $0x70] sm:$0xf]
        %v276 = vld [vmem:[%s2 + $0x74] sm:$0xf]
        %v277 = vld [vmem:[%s2 + $0x78] sm:$0xf]
        %v278 = vld [vmem:[%s2 + $0x7c] sm:$0xf]
        %v311 = vunpack.c.l.b16 %v247
        %v312 = vunpack.c.l.b16 %v248
        %v313 = vunpack.c.l.b16 %v249
        %v314 = vunpack.c.l.b16 %v250
        %v315 = vunpack.c.l.b16 %v251
        %v316 = vunpack.c.l.b16 %v252
        %v317 = vunpack.c.l.b16 %v253
        %v318 = vunpack.c.l.b16 %v254
        %v319 = vunpack.c.l.b16 %v255
        %v320 = vunpack.c.l.b16 %v256
        %v321 = vunpack.c.l.b16 %v257
        %v322 = vunpack.c.l.b16 %v258
        %v323 = vunpack.c.l.b16 %v259
        %v324 = vunpack.c.l.b16 %v260
        %v325 = vunpack.c.l.b16 %v261
        %v326 = vunpack.c.l.b16 %v262
        %v327 = vunpack.c.l.b16 %v263
        %v328 = vunpack.c.l.b16 %v264
        %v329 = vunpack.c.l.b16 %v265
        %v330 = vunpack.c.l.b16 %v266
        %v331 = vunpack.c.l.b16 %v267
        %v332 = vunpack.c.l.b16 %v268
        %v333 = vunpack.c.l.b16 %v269
        %v334 = vunpack.c.l.b16 %v270
        %v335 = vunpack.c.l.b16 %v271
        %v336 = vunpack.c.l.b16 %v272
        %v337 = vunpack.c.l.b16 %v273
        %v338 = vunpack.c.l.b16 %v274
        %v339 = vunpack.c.l.b16 %v275
        %v340 = vunpack.c.l.b16 %v276
        %v341 = vunpack.c.l.b16 %v277
        %v342 = vunpack.c.l.b16 %v278
        %v343 = vpack.c.b16 %v312, %v311
        %v344 = vpack.c.b16 %v314, %v313
        %v345 = vpack.c.b16 %v316, %v315
        %v346 = vpack.c.b16 %v318, %v317
        %v347 = vpack.c.b16 %v320, %v319
        %v348 = vpack.c.b16 %v322, %v321
        %v349 = vpack.c.b16 %v324, %v323
        %v350 = vpack.c.b16 %v326, %v325
        %v351 = vpack.c.b16 %v328, %v327
        %v352 = vpack.c.b16 %v330, %v329
        %v353 = vpack.c.b16 %v332, %v331
        %v354 = vpack.c.b16 %v334, %v333
        %v355 = vpack.c.b16 %v336, %v335
        %v356 = vpack.c.b16 %v338, %v337
        %v357 = vpack.c.b16 %v340, %v339
        %v358 = vpack.c.b16 %v342, %v341
        %375 = vmatprep.subr.bf16.mxu0 0
        %376 = vmatpush1.bf16.msra.mxu0 %v343
        %377 = vmatprep.subr.bf16.mxu0 0
        %378 = vmatpush1.bf16.msra.mxu0 %v344
        %379 = vmatprep.subr.bf16.mxu0 0
        %380 = vmatpush1.bf16.msra.mxu0 %v345
        %381 = vmatprep.subr.bf16.mxu0 0
        %382 = vmatpush1.bf16.msra.mxu0 %v346
        %383 = vmatprep.subr.bf16.mxu0 0
        %384 = vmatpush1.bf16.msra.mxu0 %v347
        %385 = vmatprep.subr.bf16.mxu0 0
        %386 = vmatpush1.bf16.msra.mxu0 %v348
        %387 = vmatprep.subr.bf16.mxu0 0
        %388 = vmatpush1.bf16.msra.mxu0 %v349
        %389 = vmatprep.subr.bf16.mxu0 0
        %390 = vmatpush1.bf16.msra.mxu0 %v350
        %391 = vmatprep.subr.bf16.mxu0 0
        %392 = vmatpush1.bf16.msra.mxu0 %v351
        %393 = vmatprep.subr.bf16.mxu0 0
        %394 = vmatpush1.bf16.msra.mxu0 %v352
        %395 = vmatprep.subr.bf16.mxu0 0
        %396 = vmatpush1.bf16.msra.mxu0 %v353
        %397 = vmatprep.subr.bf16.mxu0 0
        %398 = vmatpush1.bf16.msra.mxu0 %v354
        %399 = vmatprep.subr.bf16.mxu0 0
        %400 = vmatpush1.bf16.msra.mxu0 %v355
        %401 = vmatprep.subr.bf16.mxu0 0
        %402 = vmatpush1.bf16.msra.mxu0 %v356
        %403 = vmatprep.subr.bf16.mxu0 0
        %404 = vmatpush1.bf16.msra.mxu0 %v357
        %405 = vmatprep.subr.bf16.mxu0 0
        %406 = vmatpush1.bf16.msra.mxu0 %v358
        %407 = vmatprep.mubr.bf16.mxu0 %v246
        %408 = vmatmul.mubr.bf16.gmra.mrb[0].mxu0 %v245
        %v409 = vpop.f32.mrb[0].mxu0
        %v410 = vadd.f32 0.0, %v409
        %v411 = vpop.f32.mrb[0].mxu0
        %v412 = vpop.f32.mrb[0].mxu0
        %v413 = vpop.f32.mrb[0].mxu0
        %414 = vdwg.mxu0
        %v415 = vld [vmem:[%s3] sm:$0x3]
        %v416 = vpack.c.bf16 %v410, %v410
        %vm417 = vcmask 64512
        %v419 = vsel %vm417, %v415, 0
        %vm421 = vcmask 1043456
        %v423 = vsel %vm421, %v416, 0
        %425 = vmatprep.subr.bf16.mxu0 0
        %426 = vmatpush1.bf16.msra.mxu0 %v423
        %427 = vmatprep.subr.bf16.mxu0 0
        %428 = vmatpush1.bf16.msra.mxu0 0
        %429 = vmatprep.subr.bf16.mxu0 0
        %430 = vmatpush1.bf16.msra.mxu0 0
        %431 = vmatprep.subr.bf16.mxu0 0
        %432 = vmatpush1.bf16.msra.mxu0 0
        %433 = vmatprep.subr.bf16.mxu0 0
        %434 = vmatpush1.bf16.msra.mxu0 0
        %435 = vmatprep.subr.bf16.mxu0 0
        %436 = vmatpush1.bf16.msra.mxu0 0
        %437 = vmatprep.subr.bf16.mxu0 0
        %438 = vmatpush1.bf16.msra.mxu0 0
        %439 = vmatprep.subr.bf16.mxu0 0
        %440 = vmatpush1.bf16.msra.mxu0 0
        %441 = vmatprep.subr.bf16.mxu0 0
        %442 = vmatpush1.bf16.msra.mxu0 0
        %443 = vmatprep.subr.bf16.mxu0 0
        %444 = vmatpush1.bf16.msra.mxu0 0
        %445 = vmatprep.subr.bf16.mxu0 0
        %446 = vmatpush1.bf16.msra.mxu0 0
        %447 = vmatprep.subr.bf16.mxu0 0
        %448 = vmatpush1.bf16.msra.mxu0 0
        %449 = vmatprep.subr.bf16.mxu0 0
        %450 = vmatpush1.bf16.msra.mxu0 0
        %451 = vmatprep.subr.bf16.mxu0 0
        %452 = vmatpush1.bf16.msra.mxu0 0
        %453 = vmatprep.subr.bf16.mxu0 0
        %454 = vmatpush1.bf16.msra.mxu0 0
        %455 = vmatprep.subr.bf16.mxu0 0
        %456 = vmatpush1.bf16.msra.mxu0 0
        %457 = vmatprep.mubr.bf16.mxu0 0
        %458 = vmatmul.mubr.bf16.gmra.mrb[0].mxu0 %v419
        %v459 = vpop.f32.mrb[0].mxu0
        %v460 = vadd.f32 0.0, %v459
        %v461 = vpop.f32.mrb[0].mxu0
        %v462 = vpop.f32.mrb[0].mxu0
        %v463 = vpop.f32.mrb[0].mxu0
        %464 = vdwg.mxu0
        %vm465 = vcmask 519168
        %466 = vst.msk [vmem:[%s215] sm:$0xf] %vm465, %v460
        %s467 = sand.u32 %s131, 1
        %s468 = scalar_lea.sflag [#allocation3], %s467
        %s469 = sand.u32 %s131, 1
        %s470 = smul.addr %s469, 4
        %s471 = scalar_lea.vmem [#allocation2], %s470
        // Predicated region
        $region37: #{tpu_custom_call.1} parent=35 // pred_check
          %p472 = pneg %p141
        $region38: #{tpu_custom_call.1} parent=35 // pred_check_branch
          %474 = sbr.rel (%p472) target = $region40
        $region39: #{tpu_custom_call.1} parent=35 // pred_region
          %s476 = ssub.s32 64, 64
          %477 = vsyncadd %s468, %s476
          %s478 = sadd.s32 %s23, %s22
          %s479 = smul.addr %s478, 64
          %s480 = scalar_lea.hbm %s4, %s479
          %s482 = sshll.u32 %s471, 4
          %s483 = int_to_ptr.vmem [resolvable:$true] %s482
          %485 = dma.vmem_to_hbm [thread:$0]  %s483, 64, %s480, %s468
        $region40: #{tpu_custom_call.1} parent=35 // pred_fallthru
          _
      $region36: #{tpu_custom_call.1} parent=5 // pred_fallthru
        _
      %p486 = scmp.le.s32.totalorder 2, %s13
      // Predicated region
      $region41: #{tpu_custom_call.1} parent=5 // pred_check
        %p487 = pneg %p486
      $region42: #{tpu_custom_call.1} parent=5 // pred_check_branch
        %489 = sbr.rel (%p487) target = $region44
      $region43: #{tpu_custom_call.1} parent=5 // pred_region
        %s490 = ssub.s32 %s13, 2
        // Predicated region
        $region45: #{tpu_custom_call.1} parent=43 // pred_check
          %p491 = pneg %p147
        $region46: #{tpu_custom_call.1} parent=43 // pred_check_branch
          %493 = sbr.rel (%p491) target = $region48
        $region47: #{tpu_custom_call.1} parent=43 // pred_region
          %s494 = sand.u32 %s132, 1
          %s495 = scalar_lea.sflag [#allocation3], %s494
          %s496 = sand.u32 %s132, 1
          %s497 = smul.addr %s496, 4
          %s498 = scalar_lea.vmem [#allocation2], %s497
          %499 = dma.done %s495, 64
        $region48: #{tpu_custom_call.1} parent=43 // pred_fallthru
          _
      $region44: #{tpu_custom_call.1} parent=5 // pred_fallthru
        _
    $region6: #{tpu_custom_call.1} parent=1 // loop_footer
      %s17 = sadd.s32 1, %s13
    $region7: #{tpu_custom_call.1} parent=1 // loop_footer_branch
      %12 = sbr.rel target = $region3
    $region8: #{tpu_custom_call.1} parent=1 // loop_exit
      _
    %500 = vsyncpa [#allocation3], 1
    %s501 = scalar_lea.sflag [#allocation3], 1
    %502 = vsyncpa %s501, 1

</llo_original>
